<compile_context>
chip_gen: v6e
topology: v6e:2x2x1
jax: 0.10.0
libtpu: 0.0.40
codegen_flags: <defaults>
</compile_context>

<pallas_src>
import jax
import jax.numpy as jnp
from jax.experimental import pallas as pl
from jax.experimental.pallas import tpu as pltpu


def _round_up(x, m):
    return ((x + m - 1) // m) * m


_VMEM_BUDGET = 40 << 20          # conservative working-set target (fits v7x's 64 MiB)
_TM_CAP = 512                    # upper bound on the batch tile


def _vmem_estimate(tm, tk, f_pad, nh):
    """Rough VMEM working-set estimate (bytes) for one pipelined grid step."""
    b = 0
    b += 2 * tm * tk * 2         # x tile, bf16, double-buffered
    b += 2 * tk * f_pad * 2      # w_feat tile, bf16, double-buffered
    b += f_pad * 4               # b_feat, f32, single-buffered
    b += f_pad * nh * 2          # packed head weight, bf16, single-buffered
    b += nh * 4                  # packed head bias, f32, single-buffered
    b += 2 * tm * f_pad * 4      # feat output, f32, double-buffered
    b += 2 * tm * nh * 4         # packed logits output, f32, double-buffered
    return b


def _const_block_spec(shape, index_map):
    """BlockSpec for inputs whose block index never changes across the grid.
    Single-buffering them avoids wasting VMEM on a never-used second buffer."""
    if hasattr(pl, "Buffered"):
        try:
            return pl.BlockSpec(shape, index_map, pipeline_mode=pl.Buffered(1))
        except TypeError:
            pass
    return pl.BlockSpec(shape, index_map)


# ----------------------------- Pallas kernels --------------------------------

def _fused_cossl_kernel_single(x_ref, wf_ref, bf_ref, wh_ref, bh_ref,
                               feat_ref, heads_ref):
    """grid = (batch_tile,).  Whole contraction dim fits: one backbone matmul,
    then bias+ReLU and the fused lane-dense dual-head matmul, all in VMEM."""
    feat = jnp.dot(x_ref[...], wf_ref[...], preferred_element_type=jnp.float32)
    feat = jnp.maximum(feat + bf_ref[...], 0.0)
    feat_ref[...] = feat.astype(feat_ref.dtype)
    heads = jnp.dot(feat.astype(wh_ref.dtype), wh_ref[...],
                    preferred_element_type=jnp.float32)
    heads_ref[...] = (heads + bh_ref[...]).astype(heads_ref.dtype)


def _fused_cossl_kernel_ktiled(x_ref, wf_ref, bf_ref, wh_ref, bh_ref,
                               feat_ref, heads_ref):
    """grid = (batch_tile i, k_tile k).  Accumulate x@w_feat directly into the
    VMEM-resident feat output block (no extra scratch); on the last k step
    apply bias+ReLU in place and run the fused dual-head matmul."""
    k = pl.program_id(1)

    @pl.when(k == 0)
    def _init():
        feat_ref[...] = jnp.zeros_like(feat_ref)

    feat_ref[...] += jnp.dot(x_ref[...], wf_ref[...],
                             preferred_element_type=jnp.float32)

    @pl.when(k == pl.num_programs(1) - 1)
    def _finalize():
        feat = jnp.maximum(feat_ref[...] + bf_ref[...], 0.0)
        feat_ref[...] = feat.astype(feat_ref.dtype)
        heads = jnp.dot(feat.astype(wh_ref.dtype), wh_ref[...],
                        preferred_element_type=jnp.float32)
        heads_ref[...] = (heads + bh_ref[...]).astype(heads_ref.dtype)


# ------------------------------- pallas_call wrapper --------------------------

def _fused_forward_call(x, wf, bf, wh, bh, *, tm, tk):
    """x: [B_pad, D_pad] bf16; wf: [D_pad, F_pad] bf16; bf: [1, F_pad] f32;
    wh: [F_pad, 2*C_pad] bf16; bh: [1, 2*C_pad] f32."""
    B, D = x.shape
    F_pad = wf.shape[1]
    NH = wh.shape[1]
    k_tiles = D // tk

    est = _vmem_estimate(tm, tk, F_pad, NH)
    vmem_limit = int(min(max(2 * est, 16 << 20), 48 << 20))

    # Advisory cost estimate from the padded shapes actually processed.
    flops = 2 * B * D * F_pad + 2 * B * F_pad * NH
    bytes_accessed = (B * D * 2 + D * F_pad * 2 + F_pad * 4 + F_pad * NH * 2
                      + NH * 4 + B * F_pad * 4 + B * NH * 4)

    out_shape = (jax.ShapeDtypeStruct((B, F_pad), jnp.float32),
                 jax.ShapeDtypeStruct((B, NH), jnp.float32))

    if k_tiles > 1:
        grid = (B // tm, k_tiles)
        kernel = _fused_cossl_kernel_ktiled
        dims = ("parallel", "arbitrary")
        in_specs = [
            pl.BlockSpec((tm, tk), lambda i, k: (i, k)),          # x tile
            pl.BlockSpec((tk, F_pad), lambda i, k: (k, 0)),       # w_feat tile
            _const_block_spec((1, F_pad), lambda i, k: (0, 0)),   # b_feat
            _const_block_spec((F_pad, NH), lambda i, k: (0, 0)),  # fused head W
            _const_block_spec((1, NH), lambda i, k: (0, 0)),      # fused head b
        ]
        out_specs = (
            pl.BlockSpec((tm, F_pad), lambda i, k: (i, 0)),       # feat (resident over k)
            pl.BlockSpec((tm, NH), lambda i, k: (i, 0)),          # packed logits
        )
    else:
        grid = (B // tm,)
        kernel = _fused_cossl_kernel_single
        dims = ("parallel",)
        in_specs = [
            pl.BlockSpec((tm, D), lambda i: (i, 0)),              # x tile (full D)
            _const_block_spec((D, F_pad), lambda i: (0, 0)),      # whole w_feat
            _const_block_spec((1, F_pad), lambda i: (0, 0)),      # b_feat
            _const_block_spec((F_pad, NH), lambda i: (0, 0)),     # fused head W
            _const_block_spec((1, NH), lambda i: (0, 0)),         # fused head b
        ]
        out_specs = (
            pl.BlockSpec((tm, F_pad), lambda i: (i, 0)),
            pl.BlockSpec((tm, NH), lambda i: (i, 0)),
        )

    return pl.pallas_call(
        kernel,
        out_shape=out_shape,
        grid_spec=pltpu.PrefetchScalarGridSpec(
            num_scalar_prefetch=0,
            grid=grid,
            in_specs=in_specs,
            out_specs=out_specs,
        ),
        compiler_params=pltpu.CompilerParams(
            dimension_semantics=dims,
            vmem_limit_bytes=vmem_limit,
        ),
        cost_estimate=pl.CostEstimate(
            flops=flops, transcendentals=0, bytes_accessed=bytes_accessed),
    )(x, wf, bf, wh, bh)


# --------------------------- One-time weight packing --------------------------

def prepare_cossl_kernel_params(params, in_dim, num_features, num_classes):
    """Pad / pack weights ONCE (outside the per-call forward):
       * w_feat -> bf16 [D_pad, F_pad]; b_feat -> f32 [1, F_pad]
       * classifier + teacher_classifier packed into one lane-dense
         bf16 [F_pad, 2*C_pad] weight + f32 [1, 2*C_pad] bias."""
    F_pad = _round_up(num_features, 128)
    C_pad = _round_up(num_classes, 128)
    NH = 2 * C_pad
    D128 = _round_up(in_dim, 128)

    # Decide the contraction tiling once (it only depends on weight shapes).
    if (D128 * F_pad * 2 <= (8 << 20)
            and _vmem_estimate(_TM_CAP, D128, F_pad, NH) <= _VMEM_BUDGET):
        tk = D128                      # whole backbone weight fits: no K-tiling
    else:
        tk = 512
        while tk > 128 and _vmem_estimate(_TM_CAP, tk, F_pad, NH) > _VMEM_BUDGET:
            tk //= 2
    D_pad = _round_up(in_dim, tk)

    wf = jnp.zeros((D_pad, F_pad), jnp.bfloat16)
    wf = wf.at[:in_dim, :num_features].set(params["w_feat"].astype(jnp.bfloat16))
    bf = jnp.zeros((1, F_pad), jnp.float32).at[:, :num_features].set(params["b_feat"])

    wh = jnp.zeros((F_pad, NH), jnp.bfloat16)
    wh = wh.at[:num_features, :num_classes].set(params["w_cls"].astype(jnp.bfloat16))
    wh = wh.at[:num_features, C_pad:C_pad + num_classes].set(
        params["w_tfe"].astype(jnp.bfloat16))
    bh = jnp.zeros((1, NH), jnp.float32)
    bh = bh.at[:, :num_classes].set(params["b_cls"])
    bh = bh.at[:, C_pad:C_pad + num_classes].set(params["b_tfe"])

    return {
        "wf": wf, "bf": bf, "wh": wh, "bh": bh,
        "in_dim": in_dim, "D_pad": D_pad, "tk": tk,
        "F": num_features, "F_pad": F_pad,
        "C": num_classes, "C_pad": C_pad, "NH": NH,
    }


# --------------------------------- Forward ------------------------------------

def cossl_net_forward(x_nchw, packed):
    """Forward pass of CoSSL_Net; returns the same dict keys as the PyTorch module."""
    B = x_nchw.shape[0]
    x_flat = x_nchw.reshape(B, -1)
    assert x_flat.shape[1] == packed["in_dim"]

    D_pad, tk = packed["D_pad"], packed["tk"]

    # Batch tile: at least 2 tiles when possible so v7x's two TensorCores both
    # get work on the "parallel" axis.
    B8 = _round_up(B, 8)
    if B8 <= 8:
        tm = 8
    else:
        tm = min(_TM_CAP, _round_up((B8 + 1) // 2, 8))
    B_pad = _round_up(B, tm)

    # Pad / cast the activations only when the shape actually requires padding.
    # bf16 operands run at native MXU rate; accumulation stays f32 in-kernel.
    if (B_pad, D_pad) == x_flat.shape:
        x_in = x_flat.astype(jnp.bfloat16)
    else:
        x_in = jnp.zeros((B_pad, D_pad), jnp.bfloat16)
        x_in = x_in.at[:B, :x_flat.shape[1]].set(x_flat.astype(jnp.bfloat16))

    feat_p, heads_p = _fused_forward_call(
        x_in, packed["wf"], packed["bf"], packed["wh"], packed["bh"], tm=tm, tk=tk)

    C, C_pad = packed["C"], packed["C_pad"]
    return {
        "feat": feat_p[:B, :packed["F"]],
        "logits": heads_p[:B, :C],
        "logits_tfe": heads_p[:B, C_pad:C_pad + C],
    }


# --------------------------- Parameter setup ----------------------------------

def _linear_init(key, fan_in, fan_out):
    """Mimic torch.nn.Linear default init: U(-1/sqrt(fan_in), 1/sqrt(fan_in))."""
    kw, kb = jax.random.split(key)
    bound = 1.0 / jnp.sqrt(jnp.float32(fan_in))
    # Stored transposed to [in, out] so the kernel computes feat @ W.
    w = jax.random.uniform(kw, (fan_in, fan_out), jnp.float32, -bound, bound)
    b = jax.random.uniform(kb, (1, fan_out), jnp.float32, -bound, bound)
    return w, b


def make_cossl_params(key, in_dim, num_features, num_classes):
    k0, k1, k2, k3 = jax.random.split(key, 4)
    params = {}
    # TODO(synk): the real backbone is an arbitrary external nn.Module; a
    # flatten -> Linear -> ReLU stub returning {'feat': ...} is used here.
    params["w_feat"], params["b_feat"] = _linear_init(k0, in_dim, num_features)
    # backbone.classifier: Linear(num_features, num_classes)
    params["w_cls"], params["b_cls"] = _linear_init(k1, num_features, num_classes)
    # teacher_classifier: Linear(num_features, num_classes, bias=True)
    params["w_tfe"], params["b_tfe"] = _linear_init(k2, num_features, num_classes)
    # inver_aux_classifier: module parameter, NOT used in forward().
    params["w_iac"], params["b_iac"] = _linear_init(k3, num_features, num_classes)
    return params


# ----------------------------------- Main --------------------------------------

if __name__ == "__main__":
    key = jax.random.PRNGKey(0)
    kx, kp = jax.random.split(key)

    B, C_in, H, W = 2, 4, 16, 16        # small NCHW test shape
    num_features = 32
    num_classes = 10
    in_dim = C_in * H * W

    x = jax.random.normal(kx, (B, C_in, H, W), jnp.float32)
    params = make_cossl_params(kp, in_dim, num_features, num_classes)
    packed = prepare_cossl_kernel_params(params, in_dim, num_features, num_classes)

    out = cossl_net_forward(x, packed)
    jax.block_until_ready(out)

    # Plain-JAX reference mirroring the kernel's bf16 operand rounding
    # (accumulation is f32 in both paths).
    x_flat = x.reshape(B, -1)
    xb = x_flat.astype(jnp.bfloat16).astype(jnp.float32)
    wfb = params["w_feat"].astype(jnp.bfloat16).astype(jnp.float32)
    feat_ref = jnp.maximum(xb @ wfb + params["b_feat"], 0.0)
    fb = feat_ref.astype(jnp.bfloat16).astype(jnp.float32)
    logits_ref = fb @ params["w_cls"].astype(jnp.bfloat16).astype(jnp.float32) + params["b_cls"]
    tfe_ref = fb @ params["w_tfe"].astype(jnp.bfloat16).astype(jnp.float32) + params["b_tfe"]

    assert out["feat"].shape == (B, num_features)
    assert out["logits"].shape == (B, num_classes)
    assert out["logits_tfe"].shape == (B, num_classes)
    assert jnp.allclose(out["feat"], feat_ref, atol=1e-2, rtol=1e-2)
    assert jnp.allclose(out["logits"], logits_ref, atol=1e-2, rtol=1e-2)
    assert jnp.allclose(out["logits_tfe"], tfe_ref, atol=1e-2, rtol=1e-2)

    print("KERNEL_OK")
</pallas_src>

<mosaic_0001>
module attributes {stable_mosaic.version = 11 : i64} {
  func.func @_fused_cossl_kernel_single(%arg0: i32, %arg1: memref<8x1024xbf16, #tpu.memory_space<vmem>>, %arg2: memref<1024x128xbf16, #tpu.memory_space<vmem>>, %arg3: memref<1x128xf32, #tpu.memory_space<vmem>>, %arg4: memref<128x256xbf16, #tpu.memory_space<vmem>>, %arg5: memref<1x256xf32, #tpu.memory_space<vmem>>, %arg6: memref<8x128xf32, #tpu.memory_space<vmem>>, %arg7: memref<8x256xf32, #tpu.memory_space<vmem>>) attributes {dimension_semantics = [#tpu.dimension_semantics<parallel>], iteration_bounds = array<i64: 1>, scalar_prefetch = 0 : i64, scratch_operands = 0 : i64, tpu.core_type = #tpu.core_type<tc>, window_params = [{transform_indices = @transform_0, window_bounds = array<i64: 8, 1024>}, {pipeline_mode = #tpu.pipeline_mode<synchronous>, transform_indices = @transform_1, window_bounds = array<i64: 1024, 128>}, {pipeline_mode = #tpu.pipeline_mode<synchronous>, transform_indices = @transform_2, window_bounds = array<i64: 1, 128>}, {pipeline_mode = #tpu.pipeline_mode<synchronous>, transform_indices = @transform_3, window_bounds = array<i64: 128, 256>}, {pipeline_mode = #tpu.pipeline_mode<synchronous>, transform_indices = @transform_4, window_bounds = array<i64: 1, 256>}, {transform_indices = @transform_5, window_bounds = array<i64: 8, 128>}, {transform_indices = @transform_6, window_bounds = array<i64: 8, 256>}]} {
    %c0 = arith.constant 0 : index
    %c0_0 = arith.constant 0 : index
    %0 = vector.load %arg1[%c0, %c0_0] : memref<8x1024xbf16, #tpu.memory_space<vmem>>, vector<8x1024xbf16>
    %c0_1 = arith.constant 0 : index
    %c0_2 = arith.constant 0 : index
    %1 = vector.load %arg2[%c0_1, %c0_2] : memref<1024x128xbf16, #tpu.memory_space<vmem>>, vector<1024x128xbf16>
    %cst = arith.constant dense<0.000000e+00> : vector<8x128xf32>
    %2 = tpu.matmul %0, %1, %cst {dimension_numbers = #tpu.dot_dimension_numbers<[1], [0], [0], [1], [0, 0, 1, 1], [], []>} : vector<8x1024xbf16>, vector<1024x128xbf16>, vector<8x128xf32> -> vector<8x128xf32>
    %c0_3 = arith.constant 0 : index
    %c0_4 = arith.constant 0 : index
    %3 = vector.load %arg3[%c0_3, %c0_4] : memref<1x128xf32, #tpu.memory_space<vmem>>, vector<1x128xf32>
    %4 = vector.broadcast %3 : vector<1x128xf32> to vector<8x128xf32>
    %5 = arith.addf %2, %4 : vector<8x128xf32>
    %cst_5 = arith.constant 0.000000e+00 : f32
    %6 = vector.broadcast %cst_5 : f32 to vector<8x128xf32>
    %7 = arith.maximumf %5, %6 : vector<8x128xf32>
    %c0_6 = arith.constant 0 : index
    %c0_7 = arith.constant 0 : index
    %8 = vector.load %arg6[%c0_6, %c0_7] : memref<8x128xf32, #tpu.memory_space<vmem>>, vector<8x128xf32>
    tpu.vector_store %arg6[%c0_6, %c0_7], %7 {strides = array<i32>} : memref<8x128xf32, #tpu.memory_space<vmem>>, vector<8x128xf32>,
    %9 = arith.truncf %7 : vector<8x128xf32> to vector<8x128xbf16>
    %c0_8 = arith.constant 0 : index
    %c0_9 = arith.constant 0 : index
    %10 = vector.load %arg4[%c0_8, %c0_9] : memref<128x256xbf16, #tpu.memory_space<vmem>>, vector<128x256xbf16>
    %cst_10 = arith.constant dense<0.000000e+00> : vector<8x256xf32>
    %11 = tpu.matmul %9, %10, %cst_10 {dimension_numbers = #tpu.dot_dimension_numbers<[1], [0], [0], [1], [0, 0, 1, 1], [], []>} : vector<8x128xbf16>, vector<128x256xbf16>, vector<8x256xf32> -> vector<8x256xf32>
    %c0_11 = arith.constant 0 : index
    %c0_12 = arith.constant 0 : index
    %12 = vector.load %arg5[%c0_11, %c0_12] : memref<1x256xf32, #tpu.memory_space<vmem>>, vector<1x256xf32>
    %13 = vector.broadcast %12 : vector<1x256xf32> to vector<8x256xf32>
    %14 = arith.addf %11, %13 : vector<8x256xf32>
    %c0_13 = arith.constant 0 : index
    %c0_14 = arith.constant 0 : index
    %15 = vector.load %arg7[%c0_13, %c0_14] : memref<8x256xf32, #tpu.memory_space<vmem>>, vector<8x256xf32>
    tpu.vector_store %arg7[%c0_13, %c0_14], %14 {strides = array<i32>} : memref<8x256xf32, #tpu.memory_space<vmem>>, vector<8x256xf32>,
    return
  }
  func.func @transform_0(%arg0: i32) -> (i32, i32) {
    %c0_i32 = arith.constant 0 : i32
    %c0_i32_0 = arith.constant 0 : i32
    return %arg0, %c0_i32 : i32, i32
  }
  func.func @transform_1(%arg0: i32) -> (i32, i32) {
    %c0_i32 = arith.constant 0 : i32
    %c0_i32_0 = arith.constant 0 : i32
    %c0_i32_1 = arith.constant 0 : i32
    return %c0_i32, %c0_i32_0 : i32, i32
  }
  func.func @transform_2(%arg0: i32) -> (i32, i32) {
    %c0_i32 = arith.constant 0 : i32
    %c0_i32_0 = arith.constant 0 : i32
    %c0_i32_1 = arith.constant 0 : i32
    return %c0_i32, %c0_i32_0 : i32, i32
  }
  func.func @transform_3(%arg0: i32) -> (i32, i32) {
    %c0_i32 = arith.constant 0 : i32
    %c0_i32_0 = arith.constant 0 : i32
    %c0_i32_1 = arith.constant 0 : i32
    return %c0_i32, %c0_i32_0 : i32, i32
  }
  func.func @transform_4(%arg0: i32) -> (i32, i32) {
    %c0_i32 = arith.constant 0 : i32
    %c0_i32_0 = arith.constant 0 : i32
    %c0_i32_1 = arith.constant 0 : i32
    return %c0_i32, %c0_i32_0 : i32, i32
  }
  func.func @transform_5(%arg0: i32) -> (i32, i32) {
    %c0_i32 = arith.constant 0 : i32
    %c0_i32_0 = arith.constant 0 : i32
    return %arg0, %c0_i32 : i32, i32
  }
  func.func @transform_6(%arg0: i32) -> (i32, i32) {
    %c0_i32 = arith.constant 0 : i32
    %c0_i32_0 = arith.constant 0 : i32
    return %arg0, %c0_i32 : i32, i32
  }
}

</mosaic_0001>

<llo_original>
// kernel: tpu_custom_call.1
$region0: #{tpu_custom_call.1}
  #allocation0 [shape = 'u32[]', space=smem, size = 0x4, offset = 0x4, fixed_abs, tag = 'smem constant byte address 0x4 - core index']
  #allocation1 [shape = 'u32[144,128]{1,0:T(1,128)}', space=vmem, size = 0x12000, scoped, tag = 'internal scratch']
  %s0 = inlined_call_operand.hbm [shape: bf16[8,1024], index: 0, kind: input, shape index: {}]
  %s1 = inlined_call_operand.hbm [shape: bf16[1024,128], index: 1, kind: input, shape index: {}]
  %s2 = inlined_call_operand.vmem [shape: f32[1,128], index: 2, kind: input, shape index: {}]
  %s3 = inlined_call_operand.hbm [shape: bf16[128,256], index: 3, kind: input, shape index: {}]
  %s4 = inlined_call_operand.vmem [shape: f32[1,256], index: 4, kind: input, shape index: {}]
  %s5 = inlined_call_operand.hbm [shape: f32[8,128], index: 5, kind: output, shape index: {0}]
  %s6 = inlined_call_operand.hbm [shape: f32[8,256], index: 6, kind: output, shape index: {1}]
  %7 = xla_tuple %s5, %s6
  %s8 = sld [smem:[#allocation0]]
  $region50: #{tpu_custom_call.1} parent=0
    _
  %s10 = ssub.s32 1, %s8
  %s11 = scalar_select 0, %s10, %s8
  $region1: #{tpu_custom_call.1} parent=0
    #allocation2 [shape = 'u8[16384]{0}', space=vmem, size = 0x4000, scoped, tag = 'input window, operand 0, single buffered']
    #allocation3 [shape = 's32[1]{0}', space=sflag, size = 0x4, scoped, tag = 'scoped memory for tpu_custom_call.1']
    #allocation4 [shape = 's32[1]{0}', space=sflag, size = 0x4, scoped, tag = 'scoped memory for tpu_custom_call.1']
    #allocation5 [shape = 'u8[262144]{0}', space=vmem, size = 0x40000, scoped, tag = 'input window, operand 1, single buffered']
    #allocation6 [shape = 's32[1]{0}', space=sflag, size = 0x4, scoped, tag = 'scoped memory for tpu_custom_call.1']
    #allocation7 [shape = 'u8[65536]{0}', space=vmem, size = 0x10000, scoped, tag = 'input window, operand 3, single buffered']
    #allocation8 [shape = 'u8[4096]{0}', space=vmem, size = 0x1000, scoped, tag = 'output window, operand 0, single buffered']
    #allocation9 [shape = 'u8[8192]{0}', space=vmem, size = 0x2000, scoped, tag = 'output window, operand 1, single buffered']
    #allocation10 [shape = 's32[1]{0}', space=sflag, size = 0x4, scoped, tag = 'scoped memory for tpu_custom_call.1']
    %12 = vsyncpa [#allocation3], 0
    %13 = vsyncpa [#allocation6], 0
    %14 = vsyncpa [#allocation4], 0
    %15 = vsyncpa [#allocation10], 0
    // Predicated region
    $region2: #{tpu_custom_call.1} parent=1 // pred_check
      _
    $region3: #{tpu_custom_call.1} parent=1 // pred_check_branch
      %17 = sbr.rel (0) target = $region5
    $region4: #{tpu_custom_call.1} parent=1 // pred_region
      %s19 = ssub.s32 512, 512
      %20 = vsyncadd [#allocation3], %s19
      %s22 = sshll.u32 [#allocation2], 4
      %s23 = int_to_ptr.vmem [resolvable:$true] %s22
      %25 = dma.hbm_to_vmem [thread:$0]  %s0, 512, %s23, [#allocation3]
    $region5: #{tpu_custom_call.1} parent=1 // pred_fallthru
      _
    // Predicated region
    $region6: #{tpu_custom_call.1} parent=1 // pred_check
      _
    $region7: #{tpu_custom_call.1} parent=1 // pred_check_branch
      %27 = sbr.rel (0) target = $region9
    $region8: #{tpu_custom_call.1} parent=1 // pred_region
      %s29 = ssub.s32 8192, 8192
      %30 = vsyncadd [#allocation6], %s29
      %s31 = sshll.u32 [#allocation5], 4
      %s32 = int_to_ptr.vmem [resolvable:$true] %s31
      %37 = dma.hbm_to_vmem [thread:$0]  %s1, 8192, %s32, [#allocation6], 64, 64, 4
    $region9: #{tpu_custom_call.1} parent=1 // pred_fallthru
      _
    // Predicated region
    $region10: #{tpu_custom_call.1} parent=1 // pred_check
      _
    $region11: #{tpu_custom_call.1} parent=1 // pred_check_branch
      %39 = sbr.rel (0) target = $region13
    $region12: #{tpu_custom_call.1} parent=1 // pred_region
      _
    $region13: #{tpu_custom_call.1} parent=1 // pred_fallthru
      _
    // Predicated region
    $region14: #{tpu_custom_call.1} parent=1 // pred_check
      _
    $region15: #{tpu_custom_call.1} parent=1 // pred_check_branch
      %41 = sbr.rel (0) target = $region17
    $region16: #{tpu_custom_call.1} parent=1 // pred_region
      %s43 = ssub.s32 2048, 2048
      %44 = vsyncadd [#allocation6], %s43
      %s45 = sshll.u32 [#allocation7], 4
      %s46 = int_to_ptr.vmem [resolvable:$true] %s45
      %51 = dma.hbm_to_vmem [thread:$0]  %s3, 2048, %s46, [#allocation6], 128, 128, 8
    $region17: #{tpu_custom_call.1} parent=1 // pred_fallthru
      _
    // Predicated region
    $region18: #{tpu_custom_call.1} parent=1 // pred_check
      _
    $region19: #{tpu_custom_call.1} parent=1 // pred_check_branch
      %53 = sbr.rel (0) target = $region21
    $region20: #{tpu_custom_call.1} parent=1 // pred_region
      _
    $region21: #{tpu_custom_call.1} parent=1 // pred_fallthru
      _
    // Predicated region
    $region22: #{tpu_custom_call.1} parent=1 // pred_check
      _
    $region23: #{tpu_custom_call.1} parent=1 // pred_check_branch
      %55 = sbr.rel (0) target = $region25
    $region24: #{tpu_custom_call.1} parent=1 // pred_region
      %56 = dma.done [#allocation3], 512
    $region25: #{tpu_custom_call.1} parent=1 // pred_fallthru
      _
    // Predicated region
    $region26: #{tpu_custom_call.1} parent=1 // pred_check
      _
    $region27: #{tpu_custom_call.1} parent=1 // pred_check_branch
      %58 = sbr.rel (0) target = $region29
    $region28: #{tpu_custom_call.1} parent=1 // pred_region
      %59 = dma.done [#allocation6], 8192
    $region29: #{tpu_custom_call.1} parent=1 // pred_fallthru
      _
    // Predicated region
    $region30: #{tpu_custom_call.1} parent=1 // pred_check
      _
    $region31: #{tpu_custom_call.1} parent=1 // pred_check_branch
      %61 = sbr.rel (0) target = $region33
    $region32: #{tpu_custom_call.1} parent=1 // pred_region
      %62 = dma.done [#allocation6], 2048
    $region33: #{tpu_custom_call.1} parent=1 // pred_fallthru
      _
    %v64 = vld [vmem:[#allocation2] sm:$0xff]
    %v65 = vld [vmem:[#allocation2 + $0x8] sm:$0xff]
    %v66 = vld [vmem:[#allocation2 + $0x10] sm:$0xff]
    %v67 = vld [vmem:[#allocation2 + $0x18] sm:$0xff]
    %v68 = vld [vmem:[#allocation5] sm:$0xf]
    %v69 = vld [vmem:[#allocation5 + $0x4] sm:$0xf]
    %v70 = vld [vmem:[#allocation5 + $0x8] sm:$0xf]
    %v71 = vld [vmem:[#allocation5 + $0xc] sm:$0xf]
    %v72 = vld [vmem:[#allocation5 + $0x10] sm:$0xf]
    %v73 = vld [vmem:[#allocation5 + $0x14] sm:$0xf]
    %v74 = vld [vmem:[#allocation5 + $0x18] sm:$0xf]
    %v75 = vld [vmem:[#allocation5 + $0x1c] sm:$0xf]
    %v76 = vld [vmem:[#allocation5 + $0x20] sm:$0xf]
    %v77 = vld [vmem:[#allocation5 + $0x24] sm:$0xf]
    %v78 = vld [vmem:[#allocation5 + $0x28] sm:$0xf]
    %v79 = vld [vmem:[#allocation5 + $0x2c] sm:$0xf]
    %v80 = vld [vmem:[#allocation5 + $0x30] sm:$0xf]
    %v81 = vld [vmem:[#allocation5 + $0x34] sm:$0xf]
    %v82 = vld [vmem:[#allocation5 + $0x38] sm:$0xf]
    %v83 = vld [vmem:[#allocation5 + $0x3c] sm:$0xf]
    %v84 = vld [vmem:[#allocation5 + $0x40] sm:$0xf]
    %v85 = vld [vmem:[#allocation5 + $0x44] sm:$0xf]
    %v86 = vld [vmem:[#allocation5 + $0x48] sm:$0xf]
    %v87 = vld [vmem:[#allocation5 + $0x4c] sm:$0xf]
    %v88 = vld [vmem:[#allocation5 + $0x50] sm:$0xf]
    %v89 = vld [vmem:[#allocation5 + $0x54] sm:$0xf]
    %v90 = vld [vmem:[#allocation5 + $0x58] sm:$0xf]
    %v91 = vld [vmem:[#allocation5 + $0x5c] sm:$0xf]
    %v92 = vld [vmem:[#allocation5 + $0x60] sm:$0xf]
    %v93 = vld [vmem:[#allocation5 + $0x64] sm:$0xf]
    %v94 = vld [vmem:[#allocation5 + $0x68] sm:$0xf]
    %v95 = vld [vmem:[#allocation5 + $0x6c] sm:$0xf]
    %v96 = vld [vmem:[#allocation5 + $0x70] sm:$0xf]
    %v97 = vld [vmem:[#allocation5 + $0x74] sm:$0xf]
    %v98 = vld [vmem:[#allocation5 + $0x78] sm:$0xf]
    %v99 = vld [vmem:[#allocation5 + $0x7c] sm:$0xf]
    %v100 = vld [vmem:[#allocation5 + $0x80] sm:$0xf]
    %v101 = vld [vmem:[#allocation5 + $0x84] sm:$0xf]
    %v102 = vld [vmem:[#allocation5 + $0x88] sm:$0xf]
    %v103 = vld [vmem:[#allocation5 + $0x8c] sm:$0xf]
    %v104 = vld [vmem:[#allocation5 + $0x90] sm:$0xf]
    %v105 = vld [vmem:[#allocation5 + $0x94] sm:$0xf]
    %v106 = vld [vmem:[#allocation5 + $0x98] sm:$0xf]
    %v107 = vld [vmem:[#allocation5 + $0x9c] sm:$0xf]
    %v108 = vld [vmem:[#allocation5 + $0xa0] sm:$0xf]
    %v109 = vld [vmem:[#allocation5 + $0xa4] sm:$0xf]
    %v110 = vld [vmem:[#allocation5 + $0xa8] sm:$0xf]
    %v111 = vld [vmem:[#allocation5 + $0xac] sm:$0xf]
    %v112 = vld [vmem:[#allocation5 + $0xb0] sm:$0xf]
    %v113 = vld [vmem:[#allocation5 + $0xb4] sm:$0xf]
    %v114 = vld [vmem:[#allocation5 + $0xb8] sm:$0xf]
    %v115 = vld [vmem:[#allocation5 + $0xbc] sm:$0xf]
    %v116 = vld [vmem:[#allocation5 + $0xc0] sm:$0xf]
    %v117 = vld [vmem:[#allocation5 + $0xc4] sm:$0xf]
    %v118 = vld [vmem:[#allocation5 + $0xc8] sm:$0xf]
    %v119 = vld [vmem:[#allocation5 + $0xcc] sm:$0xf]
    %v120 = vld [vmem:[#allocation5 + $0xd0] sm:$0xf]
    %v121 = vld [vmem:[#allocation5 + $0xd4] sm:$0xf]
    %v122 = vld [vmem:[#allocation5 + $0xd8] sm:$0xf]
    %v123 = vld [vmem:[#allocation5 + $0xdc] sm:$0xf]
    %v124 = vld [vmem:[#allocation5 + $0xe0] sm:$0xf]
    %v125 = vld [vmem:[#allocation5 + $0xe4] sm:$0xf]
    %v126 = vld [vmem:[#allocation5 + $0xe8] sm:$0xf]
    %v127 = vld [vmem:[#allocation5 + $0xec] sm:$0xf]
    %v128 = vld [vmem:[#allocation5 + $0xf0] sm:$0xf]
    %v129 = vld [vmem:[#allocation5 + $0xf4] sm:$0xf]
    %v130 = vld [vmem:[#allocation5 + $0xf8] sm:$0xf]
    %v131 = vld [vmem:[#allocation5 + $0xfc] sm:$0xf]
    %v132 = vld [vmem:[#allocation5 + $0x100] sm:$0xf]
    %v133 = vld [vmem:[#allocation5 + $0x104] sm:$0xf]
    %v134 = vld [vmem:[#allocation5 + $0x108] sm:$0xf]
    %v135 = vld [vmem:[#allocation5 + $0x10c] sm:$0xf]
    %v136 = vld [vmem:[#allocation5 + $0x110] sm:$0xf]
    %v137 = vld [vmem:[#allocation5 + $0x114] sm:$0xf]
    %v138 = vld [vmem:[#allocation5 + $0x118] sm:$0xf]
    %v139 = vld [vmem:[#allocation5 + $0x11c] sm:$0xf]
    %v140 = vld [vmem:[#allocation5 + $0x120] sm:$0xf]
    %v141 = vld [vmem:[#allocation5 + $0x124] sm:$0xf]
    %v142 = vld [vmem:[#allocation5 + $0x128] sm:$0xf]
    %v143 = vld [vmem:[#allocation5 + $0x12c] sm:$0xf]
    %v144 = vld [vmem:[#allocation5 + $0x130] sm:$0xf]
    %v145 = vld [vmem:[#allocation5 + $0x134] sm:$0xf]
    %v146 = vld [vmem:[#allocation5 + $0x138] sm:$0xf]
    %v147 = vld [vmem:[#allocation5 + $0x13c] sm:$0xf]
    %v148 = vld [vmem:[#allocation5 + $0x140] sm:$0xf]
    %v149 = vld [vmem:[#allocation5 + $0x144] sm:$0xf]
    %v150 = vld [vmem:[#allocation5 + $0x148] sm:$0xf]
    %v151 = vld [vmem:[#allocation5 + $0x14c] sm:$0xf]
    %v152 = vld [vmem:[#allocation5 + $0x150] sm:$0xf]
    %v153 = vld [vmem:[#allocation5 + $0x154] sm:$0xf]
    %v154 = vld [vmem:[#allocation5 + $0x158] sm:$0xf]
    %v155 = vld [vmem:[#allocation5 + $0x15c] sm:$0xf]
    %v156 = vld [vmem:[#allocation5 + $0x160] sm:$0xf]
    %v157 = vld [vmem:[#allocation5 + $0x164] sm:$0xf]
    %v158 = vld [vmem:[#allocation5 + $0x168] sm:$0xf]
    %v159 = vld [vmem:[#allocation5 + $0x16c] sm:$0xf]
    %v160 = vld [vmem:[#allocation5 + $0x170] sm:$0xf]
    %v161 = vld [vmem:[#allocation5 + $0x174] sm:$0xf]
    %v162 = vld [vmem:[#allocation5 + $0x178] sm:$0xf]
    %v163 = vld [vmem:[#allocation5 + $0x17c] sm:$0xf]
    %v164 = vld [vmem:[#allocation5 + $0x180] sm:$0xf]
    %v165 = vld [vmem:[#allocation5 + $0x184] sm:$0xf]
    %v166 = vld [vmem:[#allocation5 + $0x188] sm:$0xf]
    %v167 = vld [vmem:[#allocation5 + $0x18c] sm:$0xf]
    %v168 = vld [vmem:[#allocation5 + $0x190] sm:$0xf]
    %v169 = vld [vmem:[#allocation5 + $0x194] sm:$0xf]
    %v170 = vld [vmem:[#allocation5 + $0x198] sm:$0xf]
    %v171 = vld [vmem:[#allocation5 + $0x19c] sm:$0xf]
    %v172 = vld [vmem:[#allocation5 + $0x1a0] sm:$0xf]
    %v173 = vld [vmem:[#allocation5 + $0x1a4] sm:$0xf]
    %v174 = vld [vmem:[#allocation5 + $0x1a8] sm:$0xf]
    %v175 = vld [vmem:[#allocation5 + $0x1ac] sm:$0xf]
    %v176 = vld [vmem:[#allocation5 + $0x1b0] sm:$0xf]
    %v177 = vld [vmem:[#allocation5 + $0x1b4] sm:$0xf]
    %v178 = vld [vmem:[#allocation5 + $0x1b8] sm:$0xf]
    %v179 = vld [vmem:[#allocation5 + $0x1bc] sm:$0xf]
    %v180 = vld [vmem:[#allocation5 + $0x1c0] sm:$0xf]
    %v181 = vld [vmem:[#allocation5 + $0x1c4] sm:$0xf]
    %v182 = vld [vmem:[#allocation5 + $0x1c8] sm:$0xf]
    %v183 = vld [vmem:[#allocation5 + $0x1cc] sm:$0xf]
    %v184 = vld [vmem:[#allocation5 + $0x1d0] sm:$0xf]
    %v185 = vld [vmem:[#allocation5 + $0x1d4] sm:$0xf]
    %v186 = vld [vmem:[#allocation5 + $0x1d8] sm:$0xf]
    %v187 = vld [vmem:[#allocation5 + $0x1dc] sm:$0xf]
    %v188 = vld [vmem:[#allocation5 + $0x1e0] sm:$0xf]
    %v189 = vld [vmem:[#allocation5 + $0x1e4] sm:$0xf]
    %v190 = vld [vmem:[#allocation5 + $0x1e8] sm:$0xf]
    %v191 = vld [vmem:[#allocation5 + $0x1ec] sm:$0xf]
    %v192 = vld [vmem:[#allocation5 + $0x1f0] sm:$0xf]
    %v193 = vld [vmem:[#allocation5 + $0x1f4] sm:$0xf]
    %v194 = vld [vmem:[#allocation5 + $0x1f8] sm:$0xf]
    %v195 = vld [vmem:[#allocation5 + $0x1fc] sm:$0xf]
    %v196 = vld [vmem:[%s2] sm:$0x1]
    %v198 = vlaneseq
    %v199 = vshrl.u32 %v198, 7
    %v200 = vsub.s32 0, %v199
    %v201 = vrot.slane %v196, %v200
    %v207 = vunpack.c.l.b16 %v64
    %v208 = vunpack.c.h.b16 %v64
    %v209 = vunpack.c.l.b16 %v65
    %v210 = vunpack.c.h.b16 %v65
    %v211 = vunpack.c.l.b16 %v66
    %v212 = vunpack.c.h.b16 %v66
    %v213 = vunpack.c.l.b16 %v67
    %v214 = vunpack.c.h.b16 %v67
    %v215 = vpack.c.b16 %v207, %v207
    %v216 = vpack.c.b16 %v208, %v208
    %v217 = vpack.c.b16 %v209, %v209
    %v218 = vpack.c.b16 %v210, %v210
    %v219 = vpack.c.b16 %v211, %v211
    %v220 = vpack.c.b16 %v212, %v212
    %v221 = vpack.c.b16 %v213, %v213
    %v222 = vpack.c.b16 %v214, %v214
    %v359 = vunpack.c.l.b16 %v68
    %v360 = vunpack.c.l.b16 %v69
    %v361 = vunpack.c.l.b16 %v70
    %v362 = vunpack.c.l.b16 %v71
    %v363 = vunpack.c.l.b16 %v72
    %v364 = vunpack.c.l.b16 %v73
    %v365 = vunpack.c.l.b16 %v74
    %v366 = vunpack.c.l.b16 %v75
    %v367 = vunpack.c.l.b16 %v76
    %v368 = vunpack.c.l.b16 %v77
    %v369 = vunpack.c.l.b16 %v78
    %v370 = vunpack.c.l.b16 %v79
    %v371 = vunpack.c.l.b16 %v80
    %v372 = vunpack.c.l.b16 %v81
    %v373 = vunpack.c.l.b16 %v82
    %v374 = vunpack.c.l.b16 %v83
    %v375 = vunpack.c.l.b16 %v84
    %v376 = vunpack.c.l.b16 %v85
    %v377 = vunpack.c.l.b16 %v86
    %v378 = vunpack.c.l.b16 %v87
    %v379 = vunpack.c.l.b16 %v88
    %v380 = vunpack.c.l.b16 %v89
    %v381 = vunpack.c.l.b16 %v90
    %v382 = vunpack.c.l.b16 %v91
    %v383 = vunpack.c.l.b16 %v92
    %v384 = vunpack.c.l.b16 %v93
    %v385 = vunpack.c.l.b16 %v94
    %v386 = vunpack.c.l.b16 %v95
    %v387 = vunpack.c.l.b16 %v96
    %v388 = vunpack.c.l.b16 %v97
    %v389 = vunpack.c.l.b16 %v98
    %v390 = vunpack.c.l.b16 %v99
    %v391 = vunpack.c.l.b16 %v100
    %v392 = vunpack.c.l.b16 %v101
    %v393 = vunpack.c.l.b16 %v102
    %v394 = vunpack.c.l.b16 %v103
    %v395 = vunpack.c.l.b16 %v104
    %v396 = vunpack.c.l.b16 %v105
    %v397 = vunpack.c.l.b16 %v106
    %v398 = vunpack.c.l.b16 %v107
    %v399 = vunpack.c.l.b16 %v108
    %v400 = vunpack.c.l.b16 %v109
    %v401 = vunpack.c.l.b16 %v110
    %v402 = vunpack.c.l.b16 %v111
    %v403 = vunpack.c.l.b16 %v112
    %v404 = vunpack.c.l.b16 %v113
    %v405 = vunpack.c.l.b16 %v114
    %v406 = vunpack.c.l.b16 %v115
    %v407 = vunpack.c.l.b16 %v116
    %v408 = vunpack.c.l.b16 %v117
    %v409 = vunpack.c.l.b16 %v118
    %v410 = vunpack.c.l.b16 %v119
    %v411 = vunpack.c.l.b16 %v120
    %v412 = vunpack.c.l.b16 %v121
    %v413 = vunpack.c.l.b16 %v122
    %v414 = vunpack.c.l.b16 %v123
    %v415 = vunpack.c.l.b16 %v124
    %v416 = vunpack.c.l.b16 %v125
    %v417 = vunpack.c.l.b16 %v126
    %v418 = vunpack.c.l.b16 %v127
    %v419 = vunpack.c.l.b16 %v128
    %v420 = vunpack.c.l.b16 %v129
    %v421 = vunpack.c.l.b16 %v130
    %v422 = vunpack.c.l.b16 %v131
    %v423 = vunpack.c.l.b16 %v132
    %v424 = vunpack.c.l.b16 %v133
    %v425 = vunpack.c.l.b16 %v134
    %v426 = vunpack.c.l.b16 %v135
    %v427 = vunpack.c.l.b16 %v136
    %v428 = vunpack.c.l.b16 %v137
    %v429 = vunpack.c.l.b16 %v138
    %v430 = vunpack.c.l.b16 %v139
    %v431 = vunpack.c.l.b16 %v140
    %v432 = vunpack.c.l.b16 %v141
    %v433 = vunpack.c.l.b16 %v142
    %v434 = vunpack.c.l.b16 %v143
    %v435 = vunpack.c.l.b16 %v144
    %v436 = vunpack.c.l.b16 %v145
    %v437 = vunpack.c.l.b16 %v146
    %v438 = vunpack.c.l.b16 %v147
    %v439 = vunpack.c.l.b16 %v148
    %v440 = vunpack.c.l.b16 %v149
    %v441 = vunpack.c.l.b16 %v150
    %v442 = vunpack.c.l.b16 %v151
    %v443 = vunpack.c.l.b16 %v152
    %v444 = vunpack.c.l.b16 %v153
    %v445 = vunpack.c.l.b16 %v154
    %v446 = vunpack.c.l.b16 %v155
    %v447 = vunpack.c.l.b16 %v156
    %v448 = vunpack.c.l.b16 %v157
    %v449 = vunpack.c.l.b16 %v158
    %v450 = vunpack.c.l.b16 %v159
    %v451 = vunpack.c.l.b16 %v160
    %v452 = vunpack.c.l.b16 %v161
    %v453 = vunpack.c.l.b16 %v162
    %v454 = vunpack.c.l.b16 %v163
    %v455 = vunpack.c.l.b16 %v164
    %v456 = vunpack.c.l.b16 %v165
    %v457 = vunpack.c.l.b16 %v166
    %v458 = vunpack.c.l.b16 %v167
    %v459 = vunpack.c.l.b16 %v168
    %v460 = vunpack.c.l.b16 %v169
    %v461 = vunpack.c.l.b16 %v170
    %v462 = vunpack.c.l.b16 %v171
    %v463 = vunpack.c.l.b16 %v172
    %v464 = vunpack.c.l.b16 %v173
    %v465 = vunpack.c.l.b16 %v174
    %v466 = vunpack.c.l.b16 %v175
    %v467 = vunpack.c.l.b16 %v176
    %v468 = vunpack.c.l.b16 %v177
    %v469 = vunpack.c.l.b16 %v178
    %v470 = vunpack.c.l.b16 %v179
    %v471 = vunpack.c.l.b16 %v180
    %v472 = vunpack.c.l.b16 %v181
    %v473 = vunpack.c.l.b16 %v182
    %v474 = vunpack.c.l.b16 %v183
    %v475 = vunpack.c.l.b16 %v184
    %v476 = vunpack.c.l.b16 %v185
    %v477 = vunpack.c.l.b16 %v186
    %v478 = vunpack.c.l.b16 %v187
    %v479 = vunpack.c.l.b16 %v188
    %v480 = vunpack.c.l.b16 %v189
    %v481 = vunpack.c.l.b16 %v190
    %v482 = vunpack.c.l.b16 %v191
    %v483 = vunpack.c.l.b16 %v192
    %v484 = vunpack.c.l.b16 %v193
    %v485 = vunpack.c.l.b16 %v194
    %v486 = vunpack.c.l.b16 %v195
    %v487 = vpack.c.b16 %v360, %v359
    %v488 = vpack.c.b16 %v362, %v361
    %v489 = vpack.c.b16 %v364, %v363
    %v490 = vpack.c.b16 %v366, %v365
    %v491 = vpack.c.b16 %v368, %v367
    %v492 = vpack.c.b16 %v370, %v369
    %v493 = vpack.c.b16 %v372, %v371
    %v494 = vpack.c.b16 %v374, %v373
    %v495 = vpack.c.b16 %v376, %v375
    %v496 = vpack.c.b16 %v378, %v377
    %v497 = vpack.c.b16 %v380, %v379
    %v498 = vpack.c.b16 %v382, %v381
    %v499 = vpack.c.b16 %v384, %v383
    %v500 = vpack.c.b16 %v386, %v385
    %v501 = vpack.c.b16 %v388, %v387
    %v502 = vpack.c.b16 %v390, %v389
    %v503 = vpack.c.b16 %v392, %v391
    %v504 = vpack.c.b16 %v394, %v393
    %v505 = vpack.c.b16 %v396, %v395
    %v506 = vpack.c.b16 %v398, %v397
    %v507 = vpack.c.b16 %v400, %v399
    %v508 = vpack.c.b16 %v402, %v401
    %v509 = vpack.c.b16 %v404, %v403
    %v510 = vpack.c.b16 %v406, %v405
    %v511 = vpack.c.b16 %v408, %v407
    %v512 = vpack.c.b16 %v410, %v409
    %v513 = vpack.c.b16 %v412, %v411
    %v514 = vpack.c.b16 %v414, %v413
    %v515 = vpack.c.b16 %v416, %v415
    %v516 = vpack.c.b16 %v418, %v417
    %v517 = vpack.c.b16 %v420, %v419
    %v518 = vpack.c.b16 %v422, %v421
    %v519 = vpack.c.b16 %v424, %v423
    %v520 = vpack.c.b16 %v426, %v425
    %v521 = vpack.c.b16 %v428, %v427
    %v522 = vpack.c.b16 %v430, %v429
    %v523 = vpack.c.b16 %v432, %v431
    %v524 = vpack.c.b16 %v434, %v433
    %v525 = vpack.c.b16 %v436, %v435
    %v526 = vpack.c.b16 %v438, %v437
    %v527 = vpack.c.b16 %v440, %v439
    %v528 = vpack.c.b16 %v442, %v441
    %v529 = vpack.c.b16 %v444, %v443
    %v530 = vpack.c.b16 %v446, %v445
    %v531 = vpack.c.b16 %v448, %v447
    %v532 = vpack.c.b16 %v450, %v449
    %v533 = vpack.c.b16 %v452, %v451
    %v534 = vpack.c.b16 %v454, %v453
    %v535 = vpack.c.b16 %v456, %v455
    %v536 = vpack.c.b16 %v458, %v457
    %v537 = vpack.c.b16 %v460, %v459
    %v538 = vpack.c.b16 %v462, %v461
    %v539 = vpack.c.b16 %v464, %v463
    %v540 = vpack.c.b16 %v466, %v465
    %v541 = vpack.c.b16 %v468, %v467
    %v542 = vpack.c.b16 %v470, %v469
    %v543 = vpack.c.b16 %v472, %v471
    %v544 = vpack.c.b16 %v474, %v473
    %v545 = vpack.c.b16 %v476, %v475
    %v546 = vpack.c.b16 %v478, %v477
    %v547 = vpack.c.b16 %v480, %v479
    %v548 = vpack.c.b16 %v482, %v481
    %v549 = vpack.c.b16 %v484, %v483
    %v550 = vpack.c.b16 %v486, %v485
    %615 = vmatprep.subr.bf16.mxu0 0
    %616 = vmatpush1.bf16.msra.mxu0 %v494
    %617 = vmatprep.subr.bf16.mxu0 0
    %618 = vmatpush1.bf16.msra.mxu0 %v493
    %619 = vmatprep.subr.bf16.mxu0 0
    %620 = vmatpush1.bf16.msra.mxu0 %v492
    %621 = vmatprep.subr.bf16.mxu0 0
    %622 = vmatpush1.bf16.msra.mxu0 %v491
    %623 = vmatprep.subr.bf16.mxu0 0
    %624 = vmatpush1.bf16.msra.mxu0 %v490
    %625 = vmatprep.subr.bf16.mxu0 0
    %626 = vmatpush1.bf16.msra.mxu0 %v489
    %627 = vmatprep.subr.bf16.mxu0 0
    %628 = vmatpush1.bf16.msra.mxu0 %v488
    %629 = vmatprep.subr.bf16.mxu0 0
    %630 = vmatpush1.bf16.msra.mxu0 %v487
    %631 = vmatprep.subr.bf16.mxu0 0
    %632 = vmatpush2.bf16.msra.mxu0 %v502
    %633 = vmatprep.subr.bf16.mxu0 0
    %634 = vmatpush2.bf16.msra.mxu0 %v501
    %635 = vmatprep.subr.bf16.mxu0 0
    %636 = vmatpush2.bf16.msra.mxu0 %v500
    %637 = vmatprep.subr.bf16.mxu0 0
    %638 = vmatpush2.bf16.msra.mxu0 %v499
    %639 = vmatprep.subr.bf16.mxu0 0
    %640 = vmatpush2.bf16.msra.mxu0 %v498
    %641 = vmatprep.subr.bf16.mxu0 0
    %642 = vmatpush2.bf16.msra.mxu0 %v497
    %643 = vmatprep.subr.bf16.mxu0 0
    %644 = vmatpush2.bf16.msra.mxu0 %v496
    %645 = vmatprep.subr.bf16.mxu0 0
    %646 = vmatpush2.bf16.msra.mxu0 %v495
    %647 = vmatprep.mubr.bf16.mxu0 %v216
    %648 = vmatmul.mubr.bf16.gmra.mxu0 %v215
    %v649 = vpop.f32.mrf.mxu0
    %v650 = vadd.f32 %v201, %v649
    %v651 = vpop.f32.mrf.mxu0
    %v652 = vpop.f32.mrf.mxu0
    %v653 = vpop.f32.mrf.mxu0
    %654 = vdwg.mxu0
    %655 = vmatprep.subr.bf16.mxu0 0
    %656 = vmatpush1.bf16.msra.mxu0 %v510
    %657 = vmatprep.subr.bf16.mxu0 0
    %658 = vmatpush1.bf16.msra.mxu0 %v509
    %659 = vmatprep.subr.bf16.mxu0 0
    %660 = vmatpush1.bf16.msra.mxu0 %v508
    %661 = vmatprep.subr.bf16.mxu0 0
    %662 = vmatpush1.bf16.msra.mxu0 %v507
    %663 = vmatprep.subr.bf16.mxu0 0
    %664 = vmatpush1.bf16.msra.mxu0 %v506
    %665 = vmatprep.subr.bf16.mxu0 0
    %666 = vmatpush1.bf16.msra.mxu0 %v505
    %667 = vmatprep.subr.bf16.mxu0 0
    %668 = vmatpush1.bf16.msra.mxu0 %v504
    %669 = vmatprep.subr.bf16.mxu0 0
    %670 = vmatpush1.bf16.msra.mxu0 %v503
    %671 = vmatprep.subr.bf16.mxu0 0
    %672 = vmatpush2.bf16.msra.mxu0 %v518
    %673 = vmatprep.subr.bf16.mxu0 0
    %674 = vmatpush2.bf16.msra.mxu0 %v517
    %675 = vmatprep.subr.bf16.mxu0 0
    %676 = vmatpush2.bf16.msra.mxu0 %v516
    %677 = vmatprep.subr.bf16.mxu0 0
    %678 = vmatpush2.bf16.msra.mxu0 %v515
    %679 = vmatprep.subr.bf16.mxu0 0
    %680 = vmatpush2.bf16.msra.mxu0 %v514
    %681 = vmatprep.subr.bf16.mxu0 0
    %682 = vmatpush2.bf16.msra.mxu0 %v513
    %683 = vmatprep.subr.bf16.mxu0 0
    %684 = vmatpush2.bf16.msra.mxu0 %v512
    %685 = vmatprep.subr.bf16.mxu0 0
    %686 = vmatpush2.bf16.msra.mxu0 %v511
    %687 = vmatprep.mubr.bf16.mxu0 %v218
    %688 = vmatmul.mubr.bf16.gmra.mxu0 %v217
    %v689 = vpop.f32.mrf.mxu0
    %v690 = vadd.f32 %v650, %v689
    %v691 = vpop.f32.mrf.mxu0
    %v692 = vpop.f32.mrf.mxu0
    %v693 = vpop.f32.mrf.mxu0
    %694 = vdwg.mxu0
    %695 = vmatprep.subr.bf16.mxu0 0
    %696 = vmatpush1.bf16.msra.mxu0 %v526
    %697 = vmatprep.subr.bf16.mxu0 0
    %698 = vmatpush1.bf16.msra.mxu0 %v525
    %699 = vmatprep.subr.bf16.mxu0 0
    %700 = vmatpush1.bf16.msra.mxu0 %v524
    %701 = vmatprep.subr.bf16.mxu0 0
    %702 = vmatpush1.bf16.msra.mxu0 %v523
    %703 = vmatprep.subr.bf16.mxu0 0
    %704 = vmatpush1.bf16.msra.mxu0 %v522
    %705 = vmatprep.subr.bf16.mxu0 0
    %706 = vmatpush1.bf16.msra.mxu0 %v521
    %707 = vmatprep.subr.bf16.mxu0 0
    %708 = vmatpush1.bf16.msra.mxu0 %v520
    %709 = vmatprep.subr.bf16.mxu0 0
    %710 = vmatpush1.bf16.msra.mxu0 %v519
    %711 = vmatprep.subr.bf16.mxu0 0
    %712 = vmatpush2.bf16.msra.mxu0 %v534
    %713 = vmatprep.subr.bf16.mxu0 0
    %714 = vmatpush2.bf16.msra.mxu0 %v533
    %715 = vmatprep.subr.bf16.mxu0 0
    %716 = vmatpush2.bf16.msra.mxu0 %v532
    %717 = vmatprep.subr.bf16.mxu0 0
    %718 = vmatpush2.bf16.msra.mxu0 %v531
    %719 = vmatprep.subr.bf16.mxu0 0
    %720 = vmatpush2.bf16.msra.mxu0 %v530
    %721 = vmatprep.subr.bf16.mxu0 0
    %722 = vmatpush2.bf16.msra.mxu0 %v529
    %723 = vmatprep.subr.bf16.mxu0 0
    %724 = vmatpush2.bf16.msra.mxu0 %v528
    %725 = vmatprep.subr.bf16.mxu0 0
    %726 = vmatpush2.bf16.msra.mxu0 %v527
    %727 = vmatprep.mubr.bf16.mxu0 %v220
    %728 = vmatmul.mubr.bf16.gmra.mxu0 %v219
    %v729 = vpop.f32.mrf.mxu0
    %v730 = vadd.f32 %v690, %v729
    %v731 = vpop.f32.mrf.mxu0
    %v732 = vpop.f32.mrf.mxu0
    %v733 = vpop.f32.mrf.mxu0
    %734 = vdwg.mxu0
    %735 = vmatprep.subr.bf16.mxu0 0
    %736 = vmatpush1.bf16.msra.mxu0 %v542
    %737 = vmatprep.subr.bf16.mxu0 0
    %738 = vmatpush1.bf16.msra.mxu0 %v541
    %739 = vmatprep.subr.bf16.mxu0 0
    %740 = vmatpush1.bf16.msra.mxu0 %v540
    %741 = vmatprep.subr.bf16.mxu0 0
    %742 = vmatpush1.bf16.msra.mxu0 %v539
    %743 = vmatprep.subr.bf16.mxu0 0
    %744 = vmatpush1.bf16.msra.mxu0 %v538
    %745 = vmatprep.subr.bf16.mxu0 0
    %746 = vmatpush1.bf16.msra.mxu0 %v537
    %747 = vmatprep.subr.bf16.mxu0 0
    %748 = vmatpush1.bf16.msra.mxu0 %v536
    %749 = vmatprep.subr.bf16.mxu0 0
    %750 = vmatpush1.bf16.msra.mxu0 %v535
    %751 = vmatprep.subr.bf16.mxu0 0
    %752 = vmatpush2.bf16.msra.mxu0 %v550
    %753 = vmatprep.subr.bf16.mxu0 0
    %754 = vmatpush2.bf16.msra.mxu0 %v549
    %755 = vmatprep.subr.bf16.mxu0 0
    %756 = vmatpush2.bf16.msra.mxu0 %v548
    %757 = vmatprep.subr.bf16.mxu0 0
    %758 = vmatpush2.bf16.msra.mxu0 %v547
    %759 = vmatprep.subr.bf16.mxu0 0
    %760 = vmatpush2.bf16.msra.mxu0 %v546
    %761 = vmatprep.subr.bf16.mxu0 0
    %762 = vmatpush2.bf16.msra.mxu0 %v545
    %763 = vmatprep.subr.bf16.mxu0 0
    %764 = vmatpush2.bf16.msra.mxu0 %v544
    %765 = vmatprep.subr.bf16.mxu0 0
    %766 = vmatpush2.bf16.msra.mxu0 %v543
    %767 = vmatprep.mubr.bf16.mxu0 %v222
    %768 = vmatmul.mubr.bf16.gmra.mxu0 %v221
    %v769 = vpop.f32.mrf.mxu0
    %v770 = vadd.f32 %v730, %v769
    %v771 = vpop.f32.mrf.mxu0
    %v772 = vpop.f32.mrf.mxu0
    %v773 = vpop.f32.mrf.mxu0
    %774 = vdwg.mxu0
    %v775 = vmax.f32 %v770, 0.0
    %776 = vst [vmem:[#allocation8] sm:$0xff] %v775
    %v777 = vpack.c.bf16 %v775, %v775
    %v778 = vld [vmem:[#allocation7] sm:$0xff]
    %v779 = vld [vmem:[#allocation7 + $0x8] sm:$0xff]
    %v780 = vld [vmem:[#allocation7 + $0x10] sm:$0xff]
    %v781 = vld [vmem:[#allocation7 + $0x18] sm:$0xff]
    %v782 = vld [vmem:[#allocation7 + $0x20] sm:$0xff]
    %v783 = vld [vmem:[#allocation7 + $0x28] sm:$0xff]
    %v784 = vld [vmem:[#allocation7 + $0x30] sm:$0xff]
    %v785 = vld [vmem:[#allocation7 + $0x38] sm:$0xff]
    %v786 = vld [vmem:[#allocation7 + $0x40] sm:$0xff]
    %v787 = vld [vmem:[#allocation7 + $0x48] sm:$0xff]
    %v788 = vld [vmem:[#allocation7 + $0x50] sm:$0xff]
    %v789 = vld [vmem:[#allocation7 + $0x58] sm:$0xff]
    %v790 = vld [vmem:[#allocation7 + $0x60] sm:$0xff]
    %v791 = vld [vmem:[#allocation7 + $0x68] sm:$0xff]
    %v792 = vld [vmem:[#allocation7 + $0x70] sm:$0xff]
    %v793 = vld [vmem:[#allocation7 + $0x78] sm:$0xff]
    %v794 = vld [vmem:[%s4] sm:$0x3]
    %v796 = vlaneseq
    %v797 = vshrl.u32 %v796, 7
    %v798 = vsub.s32 0, %v797
    %v799 = vrot.slane %v794, %v798
    %v800 = vlaneseq
    %v801 = vshrl.u32 %v800, 7
    %v802 = vsub.s32 1, %v801
    %v803 = vrot.slane %v794, %v802
    %v822 = vunpack.c.l.b16 %v778
    %v823 = vunpack.c.h.b16 %v778
    %v824 = vunpack.c.l.b16 %v779
    %v825 = vunpack.c.h.b16 %v779
    %v826 = vunpack.c.l.b16 %v780
    %v827 = vunpack.c.h.b16 %v780
    %v828 = vunpack.c.l.b16 %v781
    %v829 = vunpack.c.h.b16 %v781
    %v830 = vunpack.c.l.b16 %v782
    %v831 = vunpack.c.h.b16 %v782
    %v832 = vunpack.c.l.b16 %v783
    %v833 = vunpack.c.h.b16 %v783
    %v834 = vunpack.c.l.b16 %v784
    %v835 = vunpack.c.h.b16 %v784
    %v836 = vunpack.c.l.b16 %v785
    %v837 = vunpack.c.h.b16 %v785
    %v838 = vunpack.c.l.b16 %v786
    %v839 = vunpack.c.h.b16 %v786
    %v840 = vunpack.c.l.b16 %v787
    %v841 = vunpack.c.h.b16 %v787
    %v842 = vunpack.c.l.b16 %v788
    %v843 = vunpack.c.h.b16 %v788
    %v844 = vunpack.c.l.b16 %v789
    %v845 = vunpack.c.h.b16 %v789
    %v846 = vunpack.c.l.b16 %v790
    %v847 = vunpack.c.h.b16 %v790
    %v848 = vunpack.c.l.b16 %v791
    %v849 = vunpack.c.h.b16 %v791
    %v850 = vunpack.c.l.b16 %v792
    %v851 = vunpack.c.h.b16 %v792
    %v852 = vunpack.c.l.b16 %v793
    %v853 = vunpack.c.h.b16 %v793
    %v854 = vpack.c.b16 %v824, %v822
    %v855 = vpack.c.b16 %v825, %v823
    %v856 = vpack.c.b16 %v828, %v826
    %v857 = vpack.c.b16 %v829, %v827
    %v858 = vpack.c.b16 %v832, %v830
    %v859 = vpack.c.b16 %v833, %v831
    %v860 = vpack.c.b16 %v836, %v834
    %v861 = vpack.c.b16 %v837, %v835
    %v862 = vpack.c.b16 %v840, %v838
    %v863 = vpack.c.b16 %v841, %v839
    %v864 = vpack.c.b16 %v844, %v842
    %v865 = vpack.c.b16 %v845, %v843
    %v866 = vpack.c.b16 %v848, %v846
    %v867 = vpack.c.b16 %v849, %v847
    %v868 = vpack.c.b16 %v852, %v850
    %v869 = vpack.c.b16 %v853, %v851
    %886 = vmatprep.subr.bf16.mxu0 %v869
    %887 = vmatpush1.bf16.msra.mxu0 %v868
    %888 = vmatprep.subr.bf16.mxu0 %v867
    %889 = vmatpush1.bf16.msra.mxu0 %v866
    %890 = vmatprep.subr.bf16.mxu0 %v865
    %891 = vmatpush1.bf16.msra.mxu0 %v864
    %892 = vmatprep.subr.bf16.mxu0 %v863
    %893 = vmatpush1.bf16.msra.mxu0 %v862
    %894 = vmatprep.subr.bf16.mxu0 %v861
    %895 = vmatpush1.bf16.msra.mxu0 %v860
    %896 = vmatprep.subr.bf16.mxu0 %v859
    %897 = vmatpush1.bf16.msra.mxu0 %v858
    %898 = vmatprep.subr.bf16.mxu0 %v857
    %899 = vmatpush1.bf16.msra.mxu0 %v856
    %900 = vmatprep.subr.bf16.mxu0 %v855
    %901 = vmatpush1.bf16.msra.mxu0 %v854
    %902 = vmatprep.subr.bf16.mxu0 0
    %903 = vmatpush2.bf16.msra.mxu0 0
    %904 = vmatprep.subr.bf16.mxu0 0
    %905 = vmatpush2.bf16.msra.mxu0 0
    %906 = vmatprep.subr.bf16.mxu0 0
    %907 = vmatpush2.bf16.msra.mxu0 0
    %908 = vmatprep.subr.bf16.mxu0 0
    %909 = vmatpush2.bf16.msra.mxu0 0
    %910 = vmatprep.subr.bf16.mxu0 0
    %911 = vmatpush2.bf16.msra.mxu0 0
    %912 = vmatprep.subr.bf16.mxu0 0
    %913 = vmatpush2.bf16.msra.mxu0 0
    %914 = vmatprep.subr.bf16.mxu0 0
    %915 = vmatpush2.bf16.msra.mxu0 0
    %916 = vmatprep.subr.bf16.mxu0 0
    %917 = vmatpush2.bf16.msra.mxu0 0
    %918 = vmatprep.mubr.bf16.mxu0 0
    %919 = vmatmul.mubr.bf16.gmra.mxu0 %v777
    %v920 = vpop.f32.mrf.mxu0
    %v921 = vadd.f32 %v799, %v920
    %v922 = vpop.f32.mrf.mxu0
    %v923 = vadd.f32 %v803, %v922
    %v924 = vpop.f32.mrf.mxu0
    %v925 = vpop.f32.mrf.mxu0
    %926 = vdwg.mxu0
    %927 = vst [vmem:[#allocation9] sm:$0xff] %v921
    %928 = vst [vmem:[#allocation9 + $0x8] sm:$0xff] %v923
    // Predicated region
    $region34: #{tpu_custom_call.1} parent=1 // pred_check
      _
    $region35: #{tpu_custom_call.1} parent=1 // pred_check_branch
      %930 = sbr.rel (0) target = $region37
    $region36: #{tpu_custom_call.1} parent=1 // pred_region
      %s932 = ssub.s32 128, 128
      %933 = vsyncadd [#allocation4], %s932
      %s935 = sshll.u32 [#allocation8], 4
      %s936 = int_to_ptr.vmem [resolvable:$true] %s935
      %938 = dma.vmem_to_hbm [thread:$0]  %s936, 128, %s5, [#allocation4]
    $region37: #{tpu_custom_call.1} parent=1 // pred_fallthru
      _
    // Predicated region
    $region38: #{tpu_custom_call.1} parent=1 // pred_check
      _
    $region39: #{tpu_custom_call.1} parent=1 // pred_check_branch
      %940 = sbr.rel (0) target = $region41
    $region40: #{tpu_custom_call.1} parent=1 // pred_region
      %s942 = ssub.s32 256, 256
      %943 = vsyncadd [#allocation10], %s942
      %s945 = sshll.u32 [#allocation9], 4
      %s946 = int_to_ptr.vmem [resolvable:$true] %s945
      %948 = dma.vmem_to_hbm [thread:$0]  %s946, 256, %s6, [#allocation10]
    $region41: #{tpu_custom_call.1} parent=1 // pred_fallthru
      _
    // Predicated region
    $region42: #{tpu_custom_call.1} parent=1 // pred_check
      _
    $region43: #{tpu_custom_call.1} parent=1 // pred_check_branch
      %950 = sbr.rel (0) target = $region45
    $region44: #{tpu_custom_call.1} parent=1 // pred_region
      %951 = dma.done [#allocation4], 128
    $region45: #{tpu_custom_call.1} parent=1 // pred_fallthru
      _
    // Predicated region
    $region46: #{tpu_custom_call.1} parent=1 // pred_check
      _
    $region47: #{tpu_custom_call.1} parent=1 // pred_check_branch
      %953 = sbr.rel (0) target = $region49
    $region48: #{tpu_custom_call.1} parent=1 // pred_region
      %954 = dma.done [#allocation10], 256
    $region49: #{tpu_custom_call.1} parent=1 // pred_fallthru
      _
    %955 = vsyncpa [#allocation3], 1
    %956 = vsyncpa [#allocation6], 1
    %957 = vsyncpa [#allocation4], 1
    %958 = vsyncpa [#allocation10], 1

</llo_original>
